<compile_context>
chip_gen: v7x
topology: tpu7x:2x2x1
jax: 0.10.0
libtpu: 0.0.40
codegen_flags: <defaults>
</compile_context>

<pallas_src>
import math

import jax
import jax.numpy as jnp
import numpy as np
from jax.experimental import pallas as pl
from jax.experimental.pallas import tpu as pltpu


def pair_outer_sum_kernel(lp_ref, rp_ref, out_ref):
    """out tile = row term + col term (pure streaming outer-sum).

    lp_ref : (1, TI, TJ*D)    row term, lane-replicated TJx (bias + pos_i folded in)
    rp_ref : (1, 1, 1, TJ*D)  col term for this j-tile, flattened (pos_j folded in)
    out_ref: (1, TI, TJ*D)    lane-dense collapsed (j, d) output slab
    """
    out_ref[0] = (lp_ref[0] + rp_ref[0, 0]).astype(out_ref.dtype)


def _choose_tiles(L, d_model, out_elem_bytes, target_block_bytes=2 << 20):
    """Pick (TI, TJ) dividing L with lane-dense, VMEM-friendly blocks."""
    divs = [d for d in range(1, L + 1) if L % d == 0]
    # Column tile TJ: smallest divisor whose lane width TJ*d_model is a multiple
    # of 128 (unmasked stores) and reasonably wide; otherwise fall back to
    # TJ = L (block last dim == full array dim, always legal).
    tj = L
    for d in divs:
        w = d * d_model
        if w % 128 == 0 and w >= min(2048, L * d_model):
            tj = d
            break
    # Row tile TI: largest divisor that is a sublane multiple (8) or == L while
    # keeping the output block around ~2 MiB (safe for v7x's 64 MiB VMEM with
    # double-buffered in/out, and enough grid steps to hide DMA).
    valid_ti = [d for d in divs if d % 8 == 0 or d == L]
    fits = [d for d in valid_ti
            if d * tj * d_model * out_elem_bytes <= target_block_bytes]
    ti = max(fits) if fits else min(valid_ti)
    return ti, tj


def pair_net(msa_tokens, params, d_model, *, out_dtype=jnp.float32):
    """Pallas implementation of PairNet.forward (inference)."""
    seq = msa_tokens[:, 0, :]                       # (B, L) int tokens
    B, L = seq.shape
    d_emb = d_model // 2
    k_half = d_model // 2

    # ---------------- tiny XLA-side glue (O(B*L*d_model) work) ----------------
    seq_emb = jnp.take(params["emb"], seq, axis=0).astype(jnp.float32)   # (B,L,d_emb)

    idx = jnp.arange(L, dtype=jnp.float32)          # PairNet builds idx = arange(L)
    sin_inp = idx[:, None] * params["div_term"]                          # (L, d_model//4)
    pos = jnp.concatenate([jnp.sin(sin_inp), jnp.cos(sin_inp)], -1)      # (L, k_half)
    zeros_h = jnp.zeros((L, d_model - k_half), jnp.float32)
    pos_left = jnp.concatenate([pos, zeros_h], -1)                       # add to row term
    pos_right = jnp.concatenate([zeros_h, pos], -1)                      # add to col term

    W = params["proj_w"]                            # (d_model, d_model) torch (out, in)
    bvec = params["proj_b"]                         # (d_model,)
    Wl = W[:, :d_emb].T                             # (d_emb, d_model)
    Wr = W[:, d_emb:].T                             # (d_emb, d_model)

    hp = jax.lax.Precision.HIGHEST
    lp = jnp.dot(seq_emb, Wl, precision=hp) + bvec + pos_left[None]      # (B, L, D)
    rp = jnp.dot(seq_emb, Wr, precision=hp) + pos_right[None]            # (B, L, D)

    # ---------------- tile plan + lane-dense operand layout -------------------
    out_itemsize = jnp.dtype(out_dtype).itemsize
    ti, tj = _choose_tiles(L, d_model, out_itemsize)
    lane_w = tj * d_model

    # Row term replicated TJx along the lane axis: lp_wide[b,i, s*D+d] = lp[b,i,d].
    lp_wide = jnp.tile(lp, (1, 1, tj))                                   # (B, L, TJ*D)
    # Col term flattened per j-tile: rp_flat[b,jt,0, s*D+d] = rp[b, jt*TJ+s, d].
    rp_flat = rp.reshape(B, L // tj, 1, lane_w)                          # (B, L/TJ, 1, TJ*D)

    blk_out = ti * lane_w * out_itemsize
    blk_lp = ti * lane_w * 4
    blk_rp = lane_w * 4
    vmem_limit = int(min(max(2 * (blk_out + blk_lp + blk_rp) + (2 << 20),
                             8 << 20), 32 << 20))

    out_flat = pl.pallas_call(
        pair_outer_sum_kernel,
        out_shape=jax.ShapeDtypeStruct((B, L, L * d_model), out_dtype),
        grid_spec=pltpu.PrefetchScalarGridSpec(
            num_scalar_prefetch=0,
            grid=(B, L // ti, L // tj),
            in_specs=[
                # lp block constant along j -> stays VMEM-resident across the
                # innermost axis (no re-DMA of the row term).
                pl.BlockSpec((1, ti, lane_w), lambda b, i, j: (b, i, 0)),
                pl.BlockSpec((1, 1, 1, lane_w), lambda b, i, j: (b, j, 0, 0)),
            ],
            out_specs=pl.BlockSpec((1, ti, lane_w), lambda b, i, j: (b, i, j)),
        ),
        compiler_params=pltpu.CompilerParams(
            dimension_semantics=("parallel", "parallel", "parallel"),
            vmem_limit_bytes=vmem_limit,
        ),
    )(lp_wide, rp_flat)

    # Contiguous metadata-only reshape back to the PyTorch output layout.
    return out_flat.reshape(B, L, L, d_model)


def pair_net_reference(msa_tokens, params, d_model):
    """Pure-JAX transcription of the PyTorch forward (for verification)."""
    seq = msa_tokens[:, 0, :]
    B, L = seq.shape
    d_emb = d_model // 2
    k_half = d_model // 2
    e = params["emb"][seq].astype(jnp.float32)                           # (B, L, d_emb)
    left = jnp.broadcast_to(e[:, :, None, :], (B, L, L, d_emb))
    right = jnp.broadcast_to(e[:, None, :, :], (B, L, L, d_emb))
    pair = jnp.concatenate([left, right], axis=-1)                       # (B, L, L, D)
    pair = jnp.dot(pair, params["proj_w"].T,
                   precision=jax.lax.Precision.HIGHEST) + params["proj_b"]
    idx = jnp.arange(L, dtype=jnp.float32)
    sin_inp = idx[:, None] * params["div_term"]
    emb1d = jnp.concatenate([jnp.sin(sin_inp), jnp.cos(sin_inp)], -1)    # (L, k_half)
    pe = jnp.concatenate(
        [jnp.broadcast_to(emb1d[None, :, None, :], (B, L, L, k_half)),
         jnp.broadcast_to(emb1d[None, None, :, :], (B, L, L, k_half))], axis=-1)
    return pair + pe


def make_params(key, d_model, d_seq):
    d_emb = d_model // 2
    d_half = d_model // 2
    k_emb, k_w, k_b = jax.random.split(key, 3)
    return {
        "emb": jax.random.normal(k_emb, (d_seq, d_emb), jnp.float32),
        "proj_w": jax.random.normal(k_w, (d_model, d_model), jnp.float32) * 0.05,
        "proj_b": jax.random.normal(k_b, (d_model,), jnp.float32) * 0.01,
        "div_term": jnp.exp(
            jnp.arange(0.0, d_half, 2.0, dtype=jnp.float32)
            * (-(math.log(10000.0) / d_half))
        ),
    }


if __name__ == "__main__":
    B, N_msa, L = 2, 3, 8
    d_model, d_msa = 64, 21            # PairNet defaults

    key = jax.random.PRNGKey(0)
    k_params, k_tok = jax.random.split(key)

    params = make_params(k_params, d_model, d_msa)
    msa_tokens = jax.random.randint(k_tok, (B, N_msa, L), 0, d_msa, dtype=jnp.int32)

    out = pair_net(msa_tokens, params, d_model)
    out = jax.block_until_ready(out)

    ref = pair_net_reference(msa_tokens, params, d_model)
    np.testing.assert_allclose(np.asarray(out), np.asarray(ref), rtol=1e-5, atol=1e-5)

    print("KERNEL_OK")
</pallas_src>

<mosaic_0001>
module attributes {stable_mosaic.version = 11 : i64} {
  func.func @pair_outer_sum_kernel(%arg0: i32, %arg1: i32, %arg2: i32, %arg3: memref<1x8x512xf32, #tpu.memory_space<vmem>>, %arg4: memref<1x1x1x512xf32, #tpu.memory_space<vmem>>, %arg5: memref<1x8x512xf32, #tpu.memory_space<vmem>>) attributes {dimension_semantics = [#tpu.dimension_semantics<parallel>, #tpu.dimension_semantics<parallel>, #tpu.dimension_semantics<parallel>], iteration_bounds = array<i64: 2, 1, 1>, scalar_prefetch = 0 : i64, scratch_operands = 0 : i64, tpu.core_type = #tpu.core_type<tc>, window_params = [{transform_indices = @transform_0, window_bounds = array<i64: 1, 8, 512>}, {transform_indices = @transform_1, window_bounds = array<i64: 1, 1, 1, 512>}, {transform_indices = @transform_2, window_bounds = array<i64: 1, 8, 512>}]} {
    %c0 = arith.constant 0 : index
    %c0_0 = arith.constant 0 : index
    %c0_1 = arith.constant 0 : index
    %0 = vector.load %arg3[%c0, %c0_0, %c0_1] : memref<1x8x512xf32, #tpu.memory_space<vmem>>, vector<1x8x512xf32>
    %1 = vector.shape_cast %0 : vector<1x8x512xf32> to vector<8x512xf32>
    %c0_2 = arith.constant 0 : index
    %c0_3 = arith.constant 0 : index
    %c0_4 = arith.constant 0 : index
    %c0_5 = arith.constant 0 : index
    %2 = vector.load %arg4[%c0_2, %c0_3, %c0_4, %c0_5] : memref<1x1x1x512xf32, #tpu.memory_space<vmem>>, vector<1x1x1x512xf32>
    %3 = vector.shape_cast %2 : vector<1x1x1x512xf32> to vector<1x512xf32>
    %4 = vector.broadcast %3 : vector<1x512xf32> to vector<8x512xf32>
    %5 = arith.addf %1, %4 : vector<8x512xf32>
    %c0_6 = arith.constant 0 : index
    %c0_7 = arith.constant 0 : index
    %c0_8 = arith.constant 0 : index
    %6 = vector.load %arg5[%c0_6, %c0_7, %c0_8] : memref<1x8x512xf32, #tpu.memory_space<vmem>>, vector<1x8x512xf32>
    %7 = vector.shape_cast %6 : vector<1x8x512xf32> to vector<8x512xf32>
    %8 = vector.shape_cast %5 : vector<8x512xf32> to vector<1x8x512xf32>
    tpu.vector_store %arg5[%c0_6, %c0_7, %c0_8], %8 {strides = array<i32>} : memref<1x8x512xf32, #tpu.memory_space<vmem>>, vector<1x8x512xf32>,
    return
  }
  func.func @transform_0(%arg0: i32, %arg1: i32, %arg2: i32) -> (i32, i32, i32) {
    %c0_i32 = arith.constant 0 : i32
    %c0_i32_0 = arith.constant 0 : i32
    return %arg0, %arg1, %c0_i32 : i32, i32, i32
  }
  func.func @transform_1(%arg0: i32, %arg1: i32, %arg2: i32) -> (i32, i32, i32, i32) {
    %c0_i32 = arith.constant 0 : i32
    %c0_i32_0 = arith.constant 0 : i32
    %c0_i32_1 = arith.constant 0 : i32
    return %arg0, %arg2, %c0_i32, %c0_i32_0 : i32, i32, i32, i32
  }
  func.func @transform_2(%arg0: i32, %arg1: i32, %arg2: i32) -> (i32, i32, i32) {
    %c0_i32 = arith.constant 0 : i32
    return %arg0, %arg1, %arg2 : i32, i32, i32
  }
}

</mosaic_0001>

<llo_original>
// kernel: tpu_custom_call.1
$region0: #{tpu_custom_call.1}
  #allocation0 [shape = 'u32[]', space=smem, size = 0x4, offset = 0x4, fixed_abs, tag = 'smem constant byte address 0x4 - core index']
  #allocation1 [shape = 'u32[144,128]{1,0:T(1,128)}', space=vmem, size = 0x12000, scoped, tag = 'internal scratch']
  %s0 = inlined_call_operand.hbm [shape: f32[2,8,512], index: 0, kind: input, shape index: {}]
  %s1 = inlined_call_operand.hbm [shape: f32[2,1,1,512], index: 1, kind: input, shape index: {}]
  %s2 = inlined_call_operand.hbm [shape: f32[2,8,512], index: 2, kind: output, shape index: {}]
  %s3 = sld [smem:[#allocation0]]
  $region49: #{tpu_custom_call.1} parent=0
    _
  %s5 = ssub.s32 1, %s3
  %s6 = scalar_select 0, %s5, %s3
  $region1: #{tpu_custom_call.1} parent=0
    #allocation2 [shape = 'u8[32768]{0}', space=vmem, size = 0x8000, scoped, tag = 'input window, operand 0']
    #allocation3 [shape = 's32[2]{0}', space=sflag, size = 0x8, scoped, tag = 'scoped memory for tpu_custom_call.1']
    #allocation4 [shape = 's32[2]{0}', space=sflag, size = 0x8, scoped, tag = 'scoped memory for tpu_custom_call.1']
    #allocation5 [shape = 'u8[4096]{0}', space=vmem, size = 0x1000, scoped, tag = 'input window, operand 1']
    #allocation6 [shape = 's32[2]{0}', space=sflag, size = 0x8, scoped, tag = 'scoped memory for tpu_custom_call.1']
    #allocation7 [shape = 'u8[32768]{0}', space=vmem, size = 0x8000, scoped, tag = 'output window, operand 0']
    %7 = vsyncpa [#allocation3], 0
    %s8 = scalar_lea.sflag [#allocation3], 1
    %9 = vsyncpa %s8, 0
    %10 = vsyncpa [#allocation6], 0
    %s11 = scalar_lea.sflag [#allocation6], 1
    %12 = vsyncpa %s11, 0
    %13 = vsyncpa [#allocation4], 0
    %s14 = scalar_lea.sflag [#allocation4], 1
    %15 = vsyncpa %s14, 0
    loop: start=0, step=1, limit=4
    $region2: #{tpu_custom_call.1} parent=1 // loop_pre_header
      _
    $region3: #{tpu_custom_call.1} parent=1 // loop_header
      %s17 = sphi 0, %s21
      %p18 = scmp.ge.s32.totalorder %s17, 4
      %s24 = sphi 0, %s43
      %s25 = sphi 0, %s39
      %s26 = sphi 0, %s35
      %s27 = sphi 0, %s24
      %s28 = sphi 0, %s25
      %s29 = sphi 0, %s26
      %s30 = sphi 0, %s27
      %s31 = sphi 0, %s28
      %s32 = sphi 0, %s29
      %s48 = sphi 0, %s50
      %s51 = sphi 0, %s48
      %s52 = sphi 0, %s51
      %s68 = sphi 0, %s52
      %s76 = sphi 0, %s78
      %s79 = sphi 0, %s76
      %s80 = sphi 0, %s79
      %s96 = sphi 0, %s80
      %s106 = sphi 0, %s108
      %s109 = sphi 0, %s106
      %s110 = sphi 0, %s109
      %s126 = sphi 0, %s110
    $region4: #{tpu_custom_call.1} parent=1 // loop_header_branch
      %20 = sbr.rel (%p18) target = $region8
    $region5: #{tpu_custom_call.1} parent=1 // loop_body
      %s22 = ssub.s32 %s17, 1
      %s23 = ssub.s32 %s17, 2
      %s33 = sadd.s32 1, %s26
      %p34 = scmp.ge.s32.totalorder %s33, 1
      %s35 = scalar_select %p34, 0, %s33
      %s36 = sadd.s32 1, %s25
      %s37 = scalar_select %p34, %s36, %s25
      %p38 = scmp.ge.s32.totalorder %s37, 1
      %s39 = scalar_select %p38, 0, %s37
      %s40 = sadd.s32 1, %s24
      %s41 = scalar_select %p38, %s40, %s24
      %p42 = scmp.ge.s32.totalorder %s41, 2
      %s43 = scalar_select %p42, 0, %s41
      %s44 = ssub.s32 %s24, %s43
      %s45 = ssub.s32 %s25, %s39
      %s46 = sor.u32 %s44, %s45
      %p47 = scmp.eq.s32.totalorder %s46, 0
      %s49 = sadd.s32 %s48, 1
      %s50 = scalar_select %p47, %s48, %s49
      %p53 = pneg %p47
      %p54 = scmp.eq.s32.totalorder %s17, 1
      %p55 = por %p53, %p54
      %p56 = scmp.ne.s32.totalorder %s48, %s51
      %p57 = scmp.eq.s32.totalorder %s17, 0
      %p58 = por %p56, %p57
      %p59 = scmp.ne.s32.totalorder %s48, %s51
      %p60 = scmp.eq.s32.totalorder %s22, 1
      %p61 = por %p59, %p60
      %p62 = scmp.ne.s32.totalorder %s51, %s52
      %p63 = scmp.eq.s32.totalorder %s22, 0
      %p64 = por %p62, %p63
      %p65 = scmp.ne.s32.totalorder %s51, %s52
      %p66 = scmp.eq.s32.totalorder %s23, 1
      %p67 = por %p65, %p66
      %p69 = scmp.ne.s32.totalorder %s52, %s68
      %p70 = scmp.eq.s32.totalorder %s23, 0
      %p71 = por %p69, %p70
      %s72 = ssub.s32 %s24, %s43
      %s73 = ssub.s32 %s26, %s35
      %s74 = sor.u32 %s72, %s73
      %p75 = scmp.eq.s32.totalorder %s74, 0
      %s77 = sadd.s32 %s76, 1
      %s78 = scalar_select %p75, %s76, %s77
      %p81 = pneg %p75
      %p82 = scmp.eq.s32.totalorder %s17, 1
      %p83 = por %p81, %p82
      %p84 = scmp.ne.s32.totalorder %s76, %s79
      %p85 = scmp.eq.s32.totalorder %s17, 0
      %p86 = por %p84, %p85
      %p87 = scmp.ne.s32.totalorder %s76, %s79
      %p88 = scmp.eq.s32.totalorder %s22, 1
      %p89 = por %p87, %p88
      %p90 = scmp.ne.s32.totalorder %s79, %s80
      %p91 = scmp.eq.s32.totalorder %s22, 0
      %p92 = por %p90, %p91
      %p93 = scmp.ne.s32.totalorder %s79, %s80
      %p94 = scmp.eq.s32.totalorder %s23, 1
      %p95 = por %p93, %p94
      %p97 = scmp.ne.s32.totalorder %s80, %s96
      %p98 = scmp.eq.s32.totalorder %s23, 0
      %p99 = por %p97, %p98
      %s100 = ssub.s32 %s24, %s43
      %s101 = ssub.s32 %s25, %s39
      %s102 = sor.u32 %s100, %s101
      %s103 = ssub.s32 %s26, %s35
      %s104 = sor.u32 %s102, %s103
      %p105 = scmp.eq.s32.totalorder %s104, 0
      %s107 = sadd.s32 %s106, 1
      %s108 = scalar_select %p105, %s106, %s107
      %p111 = pneg %p105
      %p112 = scmp.eq.s32.totalorder %s17, 1
      %p113 = por %p111, %p112
      %p114 = scmp.ne.s32.totalorder %s106, %s109
      %p115 = scmp.eq.s32.totalorder %s17, 0
      %p116 = por %p114, %p115
      %p117 = scmp.ne.s32.totalorder %s106, %s109
      %p118 = scmp.eq.s32.totalorder %s22, 1
      %p119 = por %p117, %p118
      %p120 = scmp.ne.s32.totalorder %s109, %s110
      %p121 = scmp.eq.s32.totalorder %s22, 0
      %p122 = por %p120, %p121
      %p123 = scmp.ne.s32.totalorder %s109, %s110
      %p124 = scmp.eq.s32.totalorder %s23, 1
      %p125 = por %p123, %p124
      %p127 = scmp.ne.s32.totalorder %s110, %s126
      %p128 = scmp.eq.s32.totalorder %s23, 0
      %p129 = por %p127, %p128
      %p130 = scmp.le.s32.totalorder 1, %s17
      %p131 = scmp.lt.s32.totalorder %s17, 3
      %p132 = pnand %p130, %p131
      %p133 = pneg %p132
      // Predicated region
      $region9: #{tpu_custom_call.1} parent=5 // pred_check
        _
      $region10: #{tpu_custom_call.1} parent=5 // pred_check_branch
        %135 = sbr.rel (%p132) target = $region12
      $region11: #{tpu_custom_call.1} parent=5 // pred_region
        %s136 = ssub.s32 %s17, 1
      $region12: #{tpu_custom_call.1} parent=5 // pred_fallthru
        _
      %p137 = scmp.lt.s32.totalorder %s17, 2
      // Predicated region
      $region13: #{tpu_custom_call.1} parent=5 // pred_check
        %p138 = pneg %p137
      $region14: #{tpu_custom_call.1} parent=5 // pred_check_branch
        %140 = sbr.rel (%p138) target = $region16
      $region15: #{tpu_custom_call.1} parent=5 // pred_region
        // Predicated region
        $region17: #{tpu_custom_call.1} parent=15 // pred_check
          %p141 = pneg %p58
        $region18: #{tpu_custom_call.1} parent=15 // pred_check_branch
          %143 = sbr.rel (%p141) target = $region20
        $region19: #{tpu_custom_call.1} parent=15 // pred_region
          %s144 = sand.u32 %s48, 1
          %s145 = scalar_lea.sflag [#allocation3], %s144
          %s146 = sand.u32 %s48, 1
          %s147 = smul.addr %s146, 32
          %s148 = scalar_lea.vmem [#allocation2], %s147
          %s150 = ssub.s32 512, 512
          %151 = vsyncadd %s145, %s150
          %s152 = smul.addr %s25, 4
          %s153 = smul.addr %s24, 4
          %s154 = sadd.s32 %s152, %s153
          %s155 = smul.addr %s154, 128
          %s156 = scalar_lea.hbm %s0, %s155
          %s158 = sshll.u32 %s148, 4
          %s159 = int_to_ptr.vmem [resolvable:$true] %s158
          %161 = dma.hbm_to_vmem [thread:$0]  %s156, 512, %s159, %s145
        $region20: #{tpu_custom_call.1} parent=15 // pred_fallthru
          _
        // Predicated region
        $region21: #{tpu_custom_call.1} parent=15 // pred_check
          %p162 = pneg %p86
        $region22: #{tpu_custom_call.1} parent=15 // pred_check_branch
          %164 = sbr.rel (%p162) target = $region24
        $region23: #{tpu_custom_call.1} parent=15 // pred_region
          %s165 = sand.u32 %s76, 1
          %s166 = scalar_lea.sflag [#allocation6], %s165
          %s167 = sand.u32 %s76, 1
          %s168 = smul.addr %s167, 4
          %s169 = scalar_lea.vmem [#allocation5], %s168
          %s171 = ssub.s32 64, 64
          %172 = vsyncadd %s166, %s171
          %s173 = smul.addr %s26, 4
          %s174 = smul.addr %s24, 4
          %s175 = sadd.s32 %s173, %s174
          %s176 = smul.addr %s175, 16
          %s177 = scalar_lea.hbm %s1, %s176
          %s179 = sshll.u32 %s169, 4
          %s180 = int_to_ptr.vmem [resolvable:$true] %s179
          %182 = dma.hbm_to_vmem [thread:$0]  %s177, 64, %s180, %s166
        $region24: #{tpu_custom_call.1} parent=15 // pred_fallthru
          _
      $region16: #{tpu_custom_call.1} parent=5 // pred_fallthru
        _
      %p183 = scmp.le.s32.totalorder 1, %s17
      %p184 = scmp.lt.s32.totalorder %s17, 3
      %p185 = pnand %p183, %p184
      %p186 = pneg %p185
      // Predicated region
      $region25: #{tpu_custom_call.1} parent=5 // pred_check
        _
      $region26: #{tpu_custom_call.1} parent=5 // pred_check_branch
        %188 = sbr.rel (%p185) target = $region28
      $region27: #{tpu_custom_call.1} parent=5 // pred_region
        %s189 = ssub.s32 %s17, 1
        %s190 = sand.u32 %s51, 1
        %s191 = scalar_lea.sflag [#allocation3], %s190
        %s192 = sand.u32 %s51, 1
        %s193 = smul.addr %s192, 32
        %s194 = scalar_lea.vmem [#allocation2], %s193
        // Predicated region
        $region29: #{tpu_custom_call.1} parent=27 // pred_check
          %p195 = pneg %p64
        $region30: #{tpu_custom_call.1} parent=27 // pred_check_branch
          %197 = sbr.rel (%p195) target = $region32
        $region31: #{tpu_custom_call.1} parent=27 // pred_region
          %198 = dma.done %s191, 512
        $region32: #{tpu_custom_call.1} parent=27 // pred_fallthru
          _
        %s199 = sand.u32 %s79, 1
        %s200 = scalar_lea.sflag [#allocation6], %s199
        %s201 = sand.u32 %s79, 1
        %s202 = smul.addr %s201, 4
        %s203 = scalar_lea.vmem [#allocation5], %s202
        // Predicated region
        $region33: #{tpu_custom_call.1} parent=27 // pred_check
          %p204 = pneg %p92
        $region34: #{tpu_custom_call.1} parent=27 // pred_check_branch
          %206 = sbr.rel (%p204) target = $region36
        $region35: #{tpu_custom_call.1} parent=27 // pred_region
          %207 = dma.done %s200, 64
        $region36: #{tpu_custom_call.1} parent=27 // pred_fallthru
          _
        %s208 = sand.u32 %s51, 1
        %s209 = scalar_lea.sflag [#allocation3], %s208
        %s210 = sand.u32 %s51, 1
        %s211 = smul.addr %s210, 32
        %s212 = scalar_lea.vmem [#allocation2], %s211
        %p213 = pneg %p64
        %p214 = pneg %p61
        %s215 = sand.u32 %s79, 1
        %s216 = scalar_lea.sflag [#allocation6], %s215
        %s217 = sand.u32 %s79, 1
        %s218 = smul.addr %s217, 4
        %s219 = scalar_lea.vmem [#allocation5], %s218
        %p220 = pneg %p92
        %p221 = pneg %p89
        %p222 = pneg %p122
        %p223 = pneg %p119
        %s224 = sand.u32 %s109, 1
        %s225 = scalar_lea.sflag [#allocation4], %s224
        %s226 = sand.u32 %s109, 1
        %s227 = smul.addr %s226, 32
        %s228 = scalar_lea.vmem [#allocation7], %s227
        %s229 = smul.u32 4, %s29
        %v230 = vld [vmem:[%s194] sm:$0xff]
        %v231 = vld [vmem:[%s194 + $0x8] sm:$0xff]
        %v232 = vld [vmem:[%s194 + $0x10] sm:$0xff]
        %v233 = vld [vmem:[%s194 + $0x18] sm:$0xff]
        %v234 = vld [vmem:[%s203] sm:$0xf]
        %v236 = vlaneseq
        %v237 = vshrl.u32 %v236, 7
        %v238 = vsub.s32 0, %v237
        %v239 = vrot.slane %v234, %v238
        %v240 = vlaneseq
        %v241 = vshrl.u32 %v240, 7
        %v242 = vsub.s32 1, %v241
        %v243 = vrot.slane %v234, %v242
        %v244 = vlaneseq
        %v245 = vshrl.u32 %v244, 7
        %v246 = vsub.s32 2, %v245
        %v247 = vrot.slane %v234, %v246
        %v248 = vlaneseq
        %v249 = vshrl.u32 %v248, 7
        %v250 = vsub.s32 3, %v249
        %v251 = vrot.slane %v234, %v250
        %v256 = vadd.f32 %v230, %v239
        %v257 = vadd.f32 %v231, %v243
        %v258 = vadd.f32 %v232, %v247
        %v259 = vadd.f32 %v233, %v251
        %260 = vst [vmem:[%s228] sm:$0xff] %v256
        %261 = vst [vmem:[%s228 + $0x8] sm:$0xff] %v257
        %262 = vst [vmem:[%s228 + $0x10] sm:$0xff] %v258
        %263 = vst [vmem:[%s228 + $0x18] sm:$0xff] %v259
        %s264 = sand.u32 %s109, 1
        %s265 = scalar_lea.sflag [#allocation4], %s264
        %s266 = sand.u32 %s109, 1
        %s267 = smul.addr %s266, 32
        %s268 = scalar_lea.vmem [#allocation7], %s267
        // Predicated region
        $region37: #{tpu_custom_call.1} parent=27 // pred_check
          %p269 = pneg %p119
        $region38: #{tpu_custom_call.1} parent=27 // pred_check_branch
          %271 = sbr.rel (%p269) target = $region40
        $region39: #{tpu_custom_call.1} parent=27 // pred_region
          %s272 = smul.u32 4, %s29
          %s274 = ssub.s32 512, 512
          %275 = vsyncadd %s265, %s274
          %s276 = smul.addr %s28, 4
          %s277 = sadd.s32 %s272, %s276
          %s278 = smul.addr %s27, 4
          %s279 = sadd.s32 %s277, %s278
          %s280 = smul.addr %s279, 128
          %s281 = scalar_lea.hbm %s2, %s280
          %s283 = sshll.u32 %s268, 4
          %s284 = int_to_ptr.vmem [resolvable:$true] %s283
          %286 = dma.vmem_to_hbm [thread:$0]  %s284, 512, %s281, %s265
        $region40: #{tpu_custom_call.1} parent=27 // pred_fallthru
          _
      $region28: #{tpu_custom_call.1} parent=5 // pred_fallthru
        _
      %p287 = scmp.le.s32.totalorder 2, %s17
      // Predicated region
      $region41: #{tpu_custom_call.1} parent=5 // pred_check
        %p288 = pneg %p287
      $region42: #{tpu_custom_call.1} parent=5 // pred_check_branch
        %290 = sbr.rel (%p288) target = $region44
      $region43: #{tpu_custom_call.1} parent=5 // pred_region
        %s291 = ssub.s32 %s17, 2
        // Predicated region
        $region45: #{tpu_custom_call.1} parent=43 // pred_check
          %p292 = pneg %p125
        $region46: #{tpu_custom_call.1} parent=43 // pred_check_branch
          %294 = sbr.rel (%p292) target = $region48
        $region47: #{tpu_custom_call.1} parent=43 // pred_region
          %s295 = sand.u32 %s110, 1
          %s296 = scalar_lea.sflag [#allocation4], %s295
          %s297 = sand.u32 %s110, 1
          %s298 = smul.addr %s297, 32
          %s299 = scalar_lea.vmem [#allocation7], %s298
          %300 = dma.done %s296, 512
        $region48: #{tpu_custom_call.1} parent=43 // pred_fallthru
          _
      $region44: #{tpu_custom_call.1} parent=5 // pred_fallthru
        _
    $region6: #{tpu_custom_call.1} parent=1 // loop_footer
      %s21 = sadd.s32 1, %s17
    $region7: #{tpu_custom_call.1} parent=1 // loop_footer_branch
      %16 = sbr.rel target = $region3
    $region8: #{tpu_custom_call.1} parent=1 // loop_exit
      _
    %301 = vsyncpa [#allocation3], 1
    %s302 = scalar_lea.sflag [#allocation3], 1
    %303 = vsyncpa %s302, 1
    %304 = vsyncpa [#allocation6], 1
    %s305 = scalar_lea.sflag [#allocation6], 1
    %306 = vsyncpa %s305, 1
    %307 = vsyncpa [#allocation4], 1
    %s308 = scalar_lea.sflag [#allocation4], 1
    %309 = vsyncpa %s308, 1

</llo_original>
